<compile_context>
chip_gen: v7x
topology: tpu7x:2x2x1
jax: 0.10.0
libtpu: 0.0.40
codegen_flags: <defaults>
</compile_context>

<pallas_src>
import functools

import jax
import jax.numpy as jnp
from jax.experimental import pallas as pl
from jax.experimental.pallas import tpu as pltpu


def _round_up(v, m):
    return (v + m - 1) // m * m


def _pick_batch_block(B, H, target_m=256):
    """Largest divisor of B whose folded GEMM M (= Bblk*H) stays <= target_m."""
    best = 1
    for d in range(1, B + 1):
        if B % d == 0 and d * H <= target_m:
            best = d
    return best


# -----------------------------------------------------------------------------
# Kernel: one grid step == one batch block, batch folded into the GEMM M dim.
# -----------------------------------------------------------------------------
def _conv_tanh_kernel(xp_ref, w_ref, b_ref, o_ref, acc_ref, *, H, KH):
    """
    xp_ref : (Bblk, H+KH-1, Kp)  H-zero-padded image slab, (w,cin) flattened on
                                 the lane axis and zero-padded to Kp (mult of 128)
    w_ref  : (KH, Kp, N)         banded block-Toeplitz weights (one GEMM per kh)
    b_ref  : (1, N)              bias tiled over the W axis (f32)
    o_ref  : (Bblk, H, N)        lane-dense output slab (N = W*Cout, mult of 128)
    acc_ref: (Bblk*H, N)         f32 VMEM accumulator scratch
    """
    Bblk, _, N = o_ref.shape
    M = Bblk * H

    # Initialize the accumulator with the broadcast bias (drops a VPU add pass).
    acc_ref[...] = jnp.broadcast_to(b_ref[...], (M, N))

    xp = xp_ref[...]                                   # one load of the whole slab
    for kh in range(KH):                               # unrolled: KH MXU GEMMs
        x_kh = xp[:, kh:kh + H, :].reshape(M, -1)      # (M, Kp), layout-preserving
        acc_ref[...] += jnp.dot(x_kh, w_ref[kh],
                                preferred_element_type=jnp.float32)

    # f32 epilogue:  tanh(conv)/2 + 0.5   (EUP tanh; VPU mul/add are idle slots)
    out = jnp.tanh(acc_ref[...]) * 0.5 + 0.5
    o_ref[...] = out.reshape(Bblk, H, N).astype(o_ref.dtype)


# -----------------------------------------------------------------------------
# One-time weight prep (cache this per weight update)
# -----------------------------------------------------------------------------
def prepare_conv_params(weight, bias, width, *, padding=1, mxu_dtype=jnp.bfloat16):
    """Banded block-Toeplitz weight + tiled bias for the kernel.

    R[kh, wi*Cin+ci, w*Cout+co] = weight[co, ci, kh, wi-w+padding]
    for 0 <= wi-w+padding < KW and 0 <= wi < W (so horizontal zero-padding is
    implicit — out-of-range taps simply hit zero rows of the band).
    """
    Cout, Cin, KH, KW = weight.shape
    assert 2 * padding == KH - 1 == KW - 1, "assumes 'same' padding, stride 1"
    W = width
    K, N = W * Cin, W * Cout
    Kp = _round_up(K, 128)

    w_hwio = jnp.transpose(weight, (2, 3, 1, 0)).astype(jnp.float32)  # (KH,KW,Cin,Cout)
    wi = jnp.arange(W)[None, :, None]
    wo = jnp.arange(W)[None, None, :]
    kw = jnp.arange(KW)[:, None, None]
    band = (wi == wo + kw - padding).astype(jnp.float32)              # (KW, W, W)
    rband = jnp.einsum('xvw,hxio->hviwo', band, w_hwio)               # (KH,W,Cin,W,Cout)
    rband = rband.reshape(KH, K, N)
    if Kp > K:
        rband = jnp.pad(rband, ((0, 0), (0, Kp - K), (0, 0)))         # aligned K = 128
    rband = rband.astype(mxu_dtype)                                   # bf16 MXU operand

    b_tile = jnp.tile(bias.astype(jnp.float32), W).reshape(1, N)      # bias per (w, co) lane
    return rband, b_tile


# -----------------------------------------------------------------------------
# Forward pass with precomputed weights
# -----------------------------------------------------------------------------
def conv_bn_tanh_2d_apply(x, rband, b_tile, *, padding=1, batch_block=None):
    """x: (B, Cin, H, W) NCHW.  Returns (B, Cout, H, W)."""
    B, Cin, H, W = x.shape
    KH, Kp, N = rband.shape
    K = W * Cin
    Hp = H + KH - 1
    Cout = N // W
    out_dtype = x.dtype
    mxu_dtype = rband.dtype

    Bblk = batch_block or _pick_batch_block(B, H)
    assert B % Bblk == 0
    steps = B // Bblk

    # One fused layout pass: NCHW -> channel-last slab (B, H, W*Cin), zero-pad
    # H for the vertical taps and the lane axis up to Kp, cast to the MXU dtype.
    x_slab = jnp.transpose(x, (0, 2, 3, 1)).reshape(B, H, K)
    x_slab = jnp.pad(x_slab, ((0, 0), (padding, KH - 1 - padding), (0, Kp - K)))
    x_slab = x_slab.astype(mxu_dtype)

    out_flat = pl.pallas_call(
        functools.partial(_conv_tanh_kernel, H=H, KH=KH),
        out_shape=jax.ShapeDtypeStruct((B, H, N), out_dtype),
        grid=(steps,),
        in_specs=[
            pl.BlockSpec((Bblk, Hp, Kp), lambda i: (i, 0, 0)),        # image slab
            pl.BlockSpec((KH, Kp, N), lambda i: (0, 0, 0)),           # weights (const)
            pl.BlockSpec((1, N), lambda i: (0, 0)),                   # tiled bias (const)
        ],
        out_specs=pl.BlockSpec((Bblk, H, N), lambda i: (i, 0, 0)),    # lane-dense
        scratch_shapes=[pltpu.VMEM((Bblk * H, N), jnp.float32)],      # f32 accumulator
        compiler_params=pltpu.CompilerParams(
            dimension_semantics=("parallel",),
            vmem_limit_bytes=32 * 1024 * 1024),
    )(x_slab, rband, b_tile)

    # (B, H, W*Cout) -> (B, Cout, H, W) to match the PyTorch NCHW contract.
    return jnp.transpose(out_flat.reshape(B, H, W, Cout), (0, 3, 1, 2))


def conv_bn_tanh_2d(x, weight, bias, *, padding=1, mxu_dtype=jnp.bfloat16,
                    batch_block=None):
    """Convenience wrapper (prep + apply).  Cache prepare_conv_params if calling
    repeatedly with the same weights."""
    rband, b_tile = prepare_conv_params(weight, bias, x.shape[3],
                                        padding=padding, mxu_dtype=mxu_dtype)
    return conv_bn_tanh_2d_apply(x, rband, b_tile, padding=padding,
                                 batch_block=batch_block)


# -----------------------------------------------------------------------------
# Pure-JAX reference (correctness check only)
# -----------------------------------------------------------------------------
def reference(x, weight, bias, *, padding=1):
    out = jax.lax.conv_general_dilated(
        x, weight, window_strides=(1, 1),
        padding=((padding, padding), (padding, padding)),
        dimension_numbers=('NCHW', 'OIHW', 'NCHW'))
    out = out + bias[None, :, None, None]
    return jnp.tanh(out) * 0.5 + 0.5


# -----------------------------------------------------------------------------
if __name__ == "__main__":
    # Small shapes consistent with the module (Conv2d 3x3, padding=1, stride=1).
    B, Cin, Cout, H, W = 2, 4, 8, 16, 16

    key = jax.random.PRNGKey(0)
    k1, k2, k3 = jax.random.split(key, 3)
    x = jax.random.normal(k1, (B, Cin, H, W), dtype=jnp.float32)
    w = jax.random.normal(k2, (Cout, Cin, 3, 3), dtype=jnp.float32) * (1.0 / (Cin * 9) ** 0.5)
    b = jax.random.normal(k3, (Cout,), dtype=jnp.float32) * 0.1

    # Toeplitz / bias prep runs once per weight update, outside the hot path.
    rband, b_tile = prepare_conv_params(w, b, W, padding=1, mxu_dtype=jnp.bfloat16)
    apply_fn = jax.jit(functools.partial(conv_bn_tanh_2d_apply, padding=1))

    out = apply_fn(x, rband, b_tile)
    out = jax.block_until_ready(out)

    # Reference with matching bf16 operand quantization (accumulation stays f32).
    xq = x.astype(jnp.bfloat16).astype(jnp.float32)
    wq = w.astype(jnp.bfloat16).astype(jnp.float32)
    ref = reference(xq, wq, b, padding=1)

    assert out.shape == (B, Cout, H, W)
    assert jnp.allclose(out, ref, atol=2e-3, rtol=2e-3), \
        f"mismatch vs reference, max abs err = {float(jnp.max(jnp.abs(out - ref)))}"

    print("KERNEL_OK")
</pallas_src>

<mosaic_0001>
module attributes {stable_mosaic.version = 11 : i64} {
  func.func @_conv_tanh_kernel(%arg0: i32, %arg1: memref<2x18x128xbf16, #tpu.memory_space<vmem>>, %arg2: memref<3x128x128xbf16, #tpu.memory_space<vmem>>, %arg3: memref<1x128xf32, #tpu.memory_space<vmem>>, %arg4: memref<2x16x128xf32, #tpu.memory_space<vmem>>, %arg5: memref<32x128xf32, #tpu.memory_space<vmem>>) attributes {dimension_semantics = [#tpu.dimension_semantics<parallel>], iteration_bounds = array<i64: 1>, scalar_prefetch = 0 : i64, scratch_operands = 1 : i64, tpu.core_type = #tpu.core_type<tc>, window_params = [{transform_indices = @transform_0, window_bounds = array<i64: 2, 18, 128>}, {pipeline_mode = #tpu.pipeline_mode<synchronous>, transform_indices = @transform_1, window_bounds = array<i64: 3, 128, 128>}, {pipeline_mode = #tpu.pipeline_mode<synchronous>, transform_indices = @transform_2, window_bounds = array<i64: 1, 128>}, {transform_indices = @transform_3, window_bounds = array<i64: 2, 16, 128>}]} {
    %c0 = arith.constant 0 : index
    %c0_0 = arith.constant 0 : index
    %0 = vector.load %arg3[%c0, %c0_0] : memref<1x128xf32, #tpu.memory_space<vmem>>, vector<1x128xf32>
    %1 = vector.shape_cast %0 : vector<1x128xf32> to vector<1x128xf32>
    %2 = vector.broadcast %1 : vector<1x128xf32> to vector<32x128xf32>
    %c0_1 = arith.constant 0 : index
    %c0_2 = arith.constant 0 : index
    %3 = vector.load %arg5[%c0_1, %c0_2] : memref<32x128xf32, #tpu.memory_space<vmem>>, vector<32x128xf32>
    tpu.vector_store %arg5[%c0_1, %c0_2], %2 {strides = array<i32>} : memref<32x128xf32, #tpu.memory_space<vmem>>, vector<32x128xf32>,
    %c0_3 = arith.constant 0 : index
    %c0_4 = arith.constant 0 : index
    %c0_5 = arith.constant 0 : index
    %4 = vector.load %arg1[%c0_3, %c0_4, %c0_5] : memref<2x18x128xbf16, #tpu.memory_space<vmem>>, vector<2x18x128xbf16>
    %5 = vector.extract_strided_slice %4 {offsets = [0, 0, 0], sizes = [2, 16, 128], strides = [1, 1, 1]} : vector<2x18x128xbf16> to vector<2x16x128xbf16>
    %6 = vector.shape_cast %5 : vector<2x16x128xbf16> to vector<32x128xbf16>
    %c0_6 = arith.constant 0 : index
    %c0_7 = arith.constant 0 : index
    %7 = vector.load %arg5[%c0_6, %c0_7] : memref<32x128xf32, #tpu.memory_space<vmem>>, vector<32x128xf32>
    %c0_8 = arith.constant 0 : index
    %c0_9 = arith.constant 0 : index
    %c0_10 = arith.constant 0 : index
    %8 = vector.load %arg2[%c0_8, %c0_9, %c0_10] : memref<3x128x128xbf16, #tpu.memory_space<vmem>>, vector<1x128x128xbf16>
    %9 = vector.shape_cast %8 : vector<1x128x128xbf16> to vector<128x128xbf16>
    %cst = arith.constant dense<0.000000e+00> : vector<32x128xf32>
    %10 = tpu.matmul %6, %9, %cst {dimension_numbers = #tpu.dot_dimension_numbers<[1], [0], [0], [1], [0, 0, 1, 1], [], []>} : vector<32x128xbf16>, vector<128x128xbf16>, vector<32x128xf32> -> vector<32x128xf32>
    %11 = arith.addf %7, %10 : vector<32x128xf32>
    %c0_11 = arith.constant 0 : index
    %c0_12 = arith.constant 0 : index
    %12 = vector.load %arg5[%c0_11, %c0_12] : memref<32x128xf32, #tpu.memory_space<vmem>>, vector<32x128xf32>
    tpu.vector_store %arg5[%c0_11, %c0_12], %11 {strides = array<i32>} : memref<32x128xf32, #tpu.memory_space<vmem>>, vector<32x128xf32>,
    %13 = vector.extract_strided_slice %4 {offsets = [0, 1, 0], sizes = [2, 16, 128], strides = [1, 1, 1]} : vector<2x18x128xbf16> to vector<2x16x128xbf16>
    %14 = vector.shape_cast %13 : vector<2x16x128xbf16> to vector<32x128xbf16>
    %c0_13 = arith.constant 0 : index
    %c0_14 = arith.constant 0 : index
    %15 = vector.load %arg5[%c0_13, %c0_14] : memref<32x128xf32, #tpu.memory_space<vmem>>, vector<32x128xf32>
    %c1 = arith.constant 1 : index
    %c0_15 = arith.constant 0 : index
    %c0_16 = arith.constant 0 : index
    %16 = vector.load %arg2[%c1, %c0_15, %c0_16] : memref<3x128x128xbf16, #tpu.memory_space<vmem>>, vector<1x128x128xbf16>
    %17 = vector.shape_cast %16 : vector<1x128x128xbf16> to vector<128x128xbf16>
    %cst_17 = arith.constant dense<0.000000e+00> : vector<32x128xf32>
    %18 = tpu.matmul %14, %17, %cst_17 {dimension_numbers = #tpu.dot_dimension_numbers<[1], [0], [0], [1], [0, 0, 1, 1], [], []>} : vector<32x128xbf16>, vector<128x128xbf16>, vector<32x128xf32> -> vector<32x128xf32>
    %19 = arith.addf %15, %18 : vector<32x128xf32>
    %c0_18 = arith.constant 0 : index
    %c0_19 = arith.constant 0 : index
    %20 = vector.load %arg5[%c0_18, %c0_19] : memref<32x128xf32, #tpu.memory_space<vmem>>, vector<32x128xf32>
    tpu.vector_store %arg5[%c0_18, %c0_19], %19 {strides = array<i32>} : memref<32x128xf32, #tpu.memory_space<vmem>>, vector<32x128xf32>,
    %21 = vector.extract_strided_slice %4 {offsets = [0, 2, 0], sizes = [2, 16, 128], strides = [1, 1, 1]} : vector<2x18x128xbf16> to vector<2x16x128xbf16>
    %22 = vector.shape_cast %21 : vector<2x16x128xbf16> to vector<32x128xbf16>
    %c0_20 = arith.constant 0 : index
    %c0_21 = arith.constant 0 : index
    %23 = vector.load %arg5[%c0_20, %c0_21] : memref<32x128xf32, #tpu.memory_space<vmem>>, vector<32x128xf32>
    %c2 = arith.constant 2 : index
    %c0_22 = arith.constant 0 : index
    %c0_23 = arith.constant 0 : index
    %24 = vector.load %arg2[%c2, %c0_22, %c0_23] : memref<3x128x128xbf16, #tpu.memory_space<vmem>>, vector<1x128x128xbf16>
    %25 = vector.shape_cast %24 : vector<1x128x128xbf16> to vector<128x128xbf16>
    %cst_24 = arith.constant dense<0.000000e+00> : vector<32x128xf32>
    %26 = tpu.matmul %22, %25, %cst_24 {dimension_numbers = #tpu.dot_dimension_numbers<[1], [0], [0], [1], [0, 0, 1, 1], [], []>} : vector<32x128xbf16>, vector<128x128xbf16>, vector<32x128xf32> -> vector<32x128xf32>
    %27 = arith.addf %23, %26 : vector<32x128xf32>
    %c0_25 = arith.constant 0 : index
    %c0_26 = arith.constant 0 : index
    %28 = vector.load %arg5[%c0_25, %c0_26] : memref<32x128xf32, #tpu.memory_space<vmem>>, vector<32x128xf32>
    tpu.vector_store %arg5[%c0_25, %c0_26], %27 {strides = array<i32>} : memref<32x128xf32, #tpu.memory_space<vmem>>, vector<32x128xf32>,
    %c0_27 = arith.constant 0 : index
    %c0_28 = arith.constant 0 : index
    %29 = vector.load %arg5[%c0_27, %c0_28] : memref<32x128xf32, #tpu.memory_space<vmem>>, vector<32x128xf32>
    %30 = math.tanh %29 : vector<32x128xf32>
    %cst_29 = arith.constant 5.000000e-01 : f32
    %31 = vector.broadcast %cst_29 : f32 to vector<32x128xf32>
    %32 = arith.mulf %30, %31 : vector<32x128xf32>
    %cst_30 = arith.constant 5.000000e-01 : f32
    %33 = vector.broadcast %cst_30 : f32 to vector<32x128xf32>
    %34 = arith.addf %32, %33 : vector<32x128xf32>
    %35 = vector.shape_cast %34 : vector<32x128xf32> to vector<2x16x128xf32>
    %c0_31 = arith.constant 0 : index
    %c0_32 = arith.constant 0 : index
    %c0_33 = arith.constant 0 : index
    %36 = vector.load %arg4[%c0_31, %c0_32, %c0_33] : memref<2x16x128xf32, #tpu.memory_space<vmem>>, vector<2x16x128xf32>
    tpu.vector_store %arg4[%c0_31, %c0_32, %c0_33], %35 {strides = array<i32>} : memref<2x16x128xf32, #tpu.memory_space<vmem>>, vector<2x16x128xf32>,
    return
  }
  func.func @transform_0(%arg0: i32) -> (i32, i32, i32) {
    %c0_i32 = arith.constant 0 : i32
    %c0_i32_0 = arith.constant 0 : i32
    %c0_i32_1 = arith.constant 0 : i32
    return %arg0, %c0_i32, %c0_i32_0 : i32, i32, i32
  }
  func.func @transform_1(%arg0: i32) -> (i32, i32, i32) {
    %c0_i32 = arith.constant 0 : i32
    %c0_i32_0 = arith.constant 0 : i32
    %c0_i32_1 = arith.constant 0 : i32
    %c0_i32_2 = arith.constant 0 : i32
    return %c0_i32, %c0_i32_0, %c0_i32_1 : i32, i32, i32
  }
  func.func @transform_2(%arg0: i32) -> (i32, i32) {
    %c0_i32 = arith.constant 0 : i32
    %c0_i32_0 = arith.constant 0 : i32
    %c0_i32_1 = arith.constant 0 : i32
    return %c0_i32, %c0_i32_0 : i32, i32
  }
  func.func @transform_3(%arg0: i32) -> (i32, i32, i32) {
    %c0_i32 = arith.constant 0 : i32
    %c0_i32_0 = arith.constant 0 : i32
    %c0_i32_1 = arith.constant 0 : i32
    return %arg0, %c0_i32, %c0_i32_0 : i32, i32, i32
  }
}

</mosaic_0001>

<llo_original>
// kernel: conv_bn_tanh_2d_apply.1
$region0: #{conv_bn_tanh_2d_apply.1}
  #allocation0 [shape = 'u32[]', space=smem, size = 0x4, offset = 0x4, fixed_abs, tag = 'smem constant byte address 0x4 - core index']
  #allocation1 [shape = 'u32[144,128]{1,0:T(1,128)}', space=vmem, size = 0x12000, scoped, tag = 'internal scratch']
  #allocation2 [shape = 'f32[32,128]{1,0:T(8,128)}', space=vmem, size = 0x4000, scoped, tag = 'scratch operand']
  %s0 = inlined_call_operand.vmem [shape: bf16[2,18,128], index: 0, kind: input, shape index: {}]
  %s1 = inlined_call_operand.vmem [shape: bf16[3,128,128], index: 1, kind: input, shape index: {}]
  %s2 = inlined_call_operand.vmem [shape: f32[1,128], index: 2, kind: input, shape index: {}]
  %s3 = inlined_call_operand.vmem [shape: f32[2,16,128], index: 3, kind: output, shape index: {}]
  %s4 = sld [smem:[#allocation0]]
  $region22: #{conv_bn_tanh_2d_apply.1} parent=0
    _
  %s6 = ssub.s32 1, %s4
  %s7 = scalar_select 0, %s6, %s4
  // Predicated region
  $region2: #{conv_bn_tanh_2d_apply.1} parent=0 // pred_check
    _
  $region3: #{conv_bn_tanh_2d_apply.1} parent=0 // pred_check_branch
    %9 = sbr.rel (0) target = $region5
  $region4: #{conv_bn_tanh_2d_apply.1} parent=0 // pred_region
    _
  $region5: #{conv_bn_tanh_2d_apply.1} parent=0 // pred_fallthru
    _
  // Predicated region
  $region6: #{conv_bn_tanh_2d_apply.1} parent=0 // pred_check
    _
  $region7: #{conv_bn_tanh_2d_apply.1} parent=0 // pred_check_branch
    %11 = sbr.rel (0) target = $region9
  $region8: #{conv_bn_tanh_2d_apply.1} parent=0 // pred_region
    _
  $region9: #{conv_bn_tanh_2d_apply.1} parent=0 // pred_fallthru
    _
  // Predicated region
  $region10: #{conv_bn_tanh_2d_apply.1} parent=0 // pred_check
    _
  $region11: #{conv_bn_tanh_2d_apply.1} parent=0 // pred_check_branch
    %13 = sbr.rel (0) target = $region13
  $region12: #{conv_bn_tanh_2d_apply.1} parent=0 // pred_region
    _
  $region13: #{conv_bn_tanh_2d_apply.1} parent=0 // pred_fallthru
    _
  %v15 = vld [vmem:[%s2] sm:$0x1]
  %v17 = vlaneseq
  %v18 = vshrl.u32 %v17, 7
  %v19 = vsub.s32 0, %v18
  %v20 = vrot.slane %v15, %v19
  %22 = vst [vmem:[#allocation2] sm:$0xff] %v20
  %23 = vst [vmem:[#allocation2 + $0x8] sm:$0xff] %v20
  %24 = vst [vmem:[#allocation2 + $0x10] sm:$0xff] %v20
  %25 = vst [vmem:[#allocation2 + $0x18] sm:$0xff] %v20
  %v26 = vld [vmem:[%s0] sm:$0xf]
  %v27 = vld [vmem:[%s0 + $0x4] sm:$0xf]
  %v28 = vld [vmem:[%s0 + $0x8] sm:$0x1]
  %v29 = vld [vmem:[%s0 + $0xc] sm:$0xf]
  %v30 = vld [vmem:[%s0 + $0x10] sm:$0xf]
  %v31 = vld [vmem:[%s0 + $0x14] sm:$0x1]
  %v32 = vld [vmem:[#allocation2] sm:$0xff]
  %v33 = vld [vmem:[#allocation2 + $0x8] sm:$0xff]
  %v34 = vld [vmem:[#allocation2 + $0x10] sm:$0xff]
  %v35 = vld [vmem:[#allocation2 + $0x18] sm:$0xff]
  %v36 = vld [vmem:[%s1] sm:$0xf]
  %v37 = vld [vmem:[%s1 + $0x4] sm:$0xf]
  %v38 = vld [vmem:[%s1 + $0x8] sm:$0xf]
  %v39 = vld [vmem:[%s1 + $0xc] sm:$0xf]
  %v40 = vld [vmem:[%s1 + $0x10] sm:$0xf]
  %v41 = vld [vmem:[%s1 + $0x14] sm:$0xf]
  %v42 = vld [vmem:[%s1 + $0x18] sm:$0xf]
  %v43 = vld [vmem:[%s1 + $0x1c] sm:$0xf]
  %v44 = vld [vmem:[%s1 + $0x20] sm:$0xf]
  %v45 = vld [vmem:[%s1 + $0x24] sm:$0xf]
  %v46 = vld [vmem:[%s1 + $0x28] sm:$0xf]
  %v47 = vld [vmem:[%s1 + $0x2c] sm:$0xf]
  %v48 = vld [vmem:[%s1 + $0x30] sm:$0xf]
  %v49 = vld [vmem:[%s1 + $0x34] sm:$0xf]
  %v50 = vld [vmem:[%s1 + $0x38] sm:$0xf]
  %v51 = vld [vmem:[%s1 + $0x3c] sm:$0xf]
  %v56 = vunpack.c.l.b16 %v26
  %v57 = vunpack.c.l.b16 %v27
  %v58 = vunpack.c.l.b16 %v29
  %v59 = vunpack.c.l.b16 %v30
  %v60 = vpack.c.b16 %v57, %v56
  %v61 = vpack.c.b16 %v59, %v58
  %v80 = vunpack.c.l.b16 %v36
  %v81 = vunpack.c.l.b16 %v37
  %v82 = vunpack.c.l.b16 %v38
  %v83 = vunpack.c.l.b16 %v39
  %v84 = vunpack.c.l.b16 %v40
  %v85 = vunpack.c.l.b16 %v41
  %v86 = vunpack.c.l.b16 %v42
  %v87 = vunpack.c.l.b16 %v43
  %v88 = vunpack.c.l.b16 %v44
  %v89 = vunpack.c.l.b16 %v45
  %v90 = vunpack.c.l.b16 %v46
  %v91 = vunpack.c.l.b16 %v47
  %v92 = vunpack.c.l.b16 %v48
  %v93 = vunpack.c.l.b16 %v49
  %v94 = vunpack.c.l.b16 %v50
  %v95 = vunpack.c.l.b16 %v51
  %v96 = vpack.c.b16 %v81, %v80
  %v97 = vpack.c.b16 %v83, %v82
  %v98 = vpack.c.b16 %v85, %v84
  %v99 = vpack.c.b16 %v87, %v86
  %v100 = vpack.c.b16 %v89, %v88
  %v101 = vpack.c.b16 %v91, %v90
  %v102 = vpack.c.b16 %v93, %v92
  %v103 = vpack.c.b16 %v95, %v94
  %112 = vmatprep.subr.bf16.mxu0 0
  %113 = vmatpush1.bf16.msra.mxu0 %v96
  %114 = vmatprep.subr.bf16.mxu0 0
  %115 = vmatpush1.bf16.msra.mxu0 %v97
  %116 = vmatprep.subr.bf16.mxu0 0
  %117 = vmatpush1.bf16.msra.mxu0 %v98
  %118 = vmatprep.subr.bf16.mxu0 0
  %119 = vmatpush1.bf16.msra.mxu0 %v99
  %120 = vmatprep.subr.bf16.mxu0 0
  %121 = vmatpush1.bf16.msra.mxu0 %v100
  %122 = vmatprep.subr.bf16.mxu0 0
  %123 = vmatpush1.bf16.msra.mxu0 %v101
  %124 = vmatprep.subr.bf16.mxu0 0
  %125 = vmatpush1.bf16.msra.mxu0 %v102
  %126 = vmatprep.subr.bf16.mxu0 0
  %127 = vmatpush1.bf16.msra.mxu0 %v103
  %128 = vmatprep.subr.bf16.mxu0 0
  %129 = vmatpush1.bf16.msra.mxu0 0
  %130 = vmatprep.subr.bf16.mxu0 0
  %131 = vmatpush1.bf16.msra.mxu0 0
  %132 = vmatprep.subr.bf16.mxu0 0
  %133 = vmatpush1.bf16.msra.mxu0 0
  %134 = vmatprep.subr.bf16.mxu0 0
  %135 = vmatpush1.bf16.msra.mxu0 0
  %136 = vmatprep.subr.bf16.mxu0 0
  %137 = vmatpush1.bf16.msra.mxu0 0
  %138 = vmatprep.subr.bf16.mxu0 0
  %139 = vmatpush1.bf16.msra.mxu0 0
  %140 = vmatprep.subr.bf16.mxu0 0
  %141 = vmatpush1.bf16.msra.mxu0 0
  %142 = vmatprep.subr.bf16.mxu0 0
  %143 = vmatpush1.bf16.msra.mxu0 0
  %144 = vmatprep.mubr.bf16.mxu0 0
  %145 = vmatmul.mubr.bf16.gmra.mrb[0].mxu0 %v60
  %v146 = vpop.f32.mrb[0].mxu0
  %v147 = vadd.f32 0.0, %v146
  %v148 = vpop.f32.mrb[0].mxu0
  %v149 = vpop.f32.mrb[0].mxu0
  %v150 = vadd.f32 0.0, %v149
  %v151 = vpop.f32.mrb[0].mxu0
  %152 = vmatprep.mubr.bf16.mxu0 0
  %153 = vmatmul.mubr.bf16.gmra.mrb[0].mxu0 %v61
  %v154 = vpop.f32.mrb[0].mxu0
  %v155 = vadd.f32 0.0, %v154
  %v156 = vpop.f32.mrb[0].mxu0
  %v157 = vpop.f32.mrb[0].mxu0
  %v158 = vadd.f32 0.0, %v157
  %v159 = vpop.f32.mrb[0].mxu0
  %160 = vdwg.mxu0
  %v161 = vadd.f32 %v32, %v147
  %v162 = vadd.f32 %v33, %v150
  %v163 = vadd.f32 %v34, %v155
  %v164 = vadd.f32 %v35, %v158
  %165 = vst [vmem:[#allocation2] sm:$0xff] %v161
  %166 = vst [vmem:[#allocation2 + $0x8] sm:$0xff] %v162
  %167 = vst [vmem:[#allocation2 + $0x10] sm:$0xff] %v163
  %168 = vst [vmem:[#allocation2 + $0x18] sm:$0xff] %v164
  %vm169 = vsmask.f32 3328
  %vm170 = vsmask.f32 7440
  %vm171 = vmor %vm169, %vm170
  %v173 = vshrl.u32 %v26, 16
  %v175 = vrot.slane %v173, 4
  %v176 = vshll.u32 %v26, 16
  %v178 = vrot.slane %v176, 5
  %v179 = vor.u32 %v175, %v178
  %v180 = vrot.slane %v179, 4
  %v182 = vshll.u32 %v27, 16
  %v184 = vrot.slane %v182, 5
  %v185 = vsel %vm171, %v180, %v184
  %v186 = vshrl.u32 %v27, 16
  %v188 = vrot.slane %v186, 4
  %v189 = vor.u32 %v188, %v184
  %v190 = vrot.slane %v189, 4
  %v192 = vshll.u32 %v28, 16
  %v194 = vrot.slane %v192, 5
  %v195 = vsel %vm171, %v190, %v194
  %v197 = vshrl.u32 %v29, 16
  %v199 = vrot.slane %v197, 4
  %v200 = vshll.u32 %v29, 16
  %v202 = vrot.slane %v200, 5
  %v203 = vor.u32 %v199, %v202
  %v204 = vrot.slane %v203, 4
  %v206 = vshll.u32 %v30, 16
  %v208 = vrot.slane %v206, 5
  %v209 = vsel %vm171, %v204, %v208
  %v210 = vshrl.u32 %v30, 16
  %v212 = vrot.slane %v210, 4
  %v213 = vor.u32 %v212, %v208
  %v214 = vrot.slane %v213, 4
  %v216 = vshll.u32 %v31, 16
  %v218 = vrot.slane %v216, 5
  %v219 = vsel %vm171, %v214, %v218
  %v220 = vld [vmem:[#allocation2] sm:$0xff]
  %v221 = vld [vmem:[#allocation2 + $0x8] sm:$0xff]
  %v222 = vld [vmem:[#allocation2 + $0x10] sm:$0xff]
  %v223 = vld [vmem:[#allocation2 + $0x18] sm:$0xff]
  %s224 = scalar_lea.vmem %s1, 64
  %v225 = vld [vmem:[%s224] sm:$0xf]
  %v226 = vld [vmem:[%s224 + $0x4] sm:$0xf]
  %v227 = vld [vmem:[%s224 + $0x8] sm:$0xf]
  %v228 = vld [vmem:[%s224 + $0xc] sm:$0xf]
  %v229 = vld [vmem:[%s224 + $0x10] sm:$0xf]
  %v230 = vld [vmem:[%s224 + $0x14] sm:$0xf]
  %v231 = vld [vmem:[%s224 + $0x18] sm:$0xf]
  %v232 = vld [vmem:[%s224 + $0x1c] sm:$0xf]
  %v233 = vld [vmem:[%s224 + $0x20] sm:$0xf]
  %v234 = vld [vmem:[%s224 + $0x24] sm:$0xf]
  %v235 = vld [vmem:[%s224 + $0x28] sm:$0xf]
  %v236 = vld [vmem:[%s224 + $0x2c] sm:$0xf]
  %v237 = vld [vmem:[%s224 + $0x30] sm:$0xf]
  %v238 = vld [vmem:[%s224 + $0x34] sm:$0xf]
  %v239 = vld [vmem:[%s224 + $0x38] sm:$0xf]
  %v240 = vld [vmem:[%s224 + $0x3c] sm:$0xf]
  %v241 = vunpack.c.l.b16 %v185
  %v242 = vunpack.c.l.b16 %v195
  %v243 = vunpack.c.l.b16 %v209
  %v244 = vunpack.c.l.b16 %v219
  %v245 = vpack.c.b16 %v242, %v241
  %v246 = vpack.c.b16 %v244, %v243
  %v265 = vunpack.c.l.b16 %v225
  %v266 = vunpack.c.l.b16 %v226
  %v267 = vunpack.c.l.b16 %v227
  %v268 = vunpack.c.l.b16 %v228
  %v269 = vunpack.c.l.b16 %v229
  %v270 = vunpack.c.l.b16 %v230
  %v271 = vunpack.c.l.b16 %v231
  %v272 = vunpack.c.l.b16 %v232
  %v273 = vunpack.c.l.b16 %v233
  %v274 = vunpack.c.l.b16 %v234
  %v275 = vunpack.c.l.b16 %v235
  %v276 = vunpack.c.l.b16 %v236
  %v277 = vunpack.c.l.b16 %v237
  %v278 = vunpack.c.l.b16 %v238
  %v279 = vunpack.c.l.b16 %v239
  %v280 = vunpack.c.l.b16 %v240
  %v281 = vpack.c.b16 %v266, %v265
  %v282 = vpack.c.b16 %v268, %v267
  %v283 = vpack.c.b16 %v270, %v269
  %v284 = vpack.c.b16 %v272, %v271
  %v285 = vpack.c.b16 %v274, %v273
  %v286 = vpack.c.b16 %v276, %v275
  %v287 = vpack.c.b16 %v278, %v277
  %v288 = vpack.c.b16 %v280, %v279
  %297 = vmatprep.subr.bf16.mxu0 0
  %298 = vmatpush1.bf16.msra.mxu0 %v281
  %299 = vmatprep.subr.bf16.mxu0 0
  %300 = vmatpush1.bf16.msra.mxu0 %v282
  %301 = vmatprep.subr.bf16.mxu0 0
  %302 = vmatpush1.bf16.msra.mxu0 %v283
  %303 = vmatprep.subr.bf16.mxu0 0
  %304 = vmatpush1.bf16.msra.mxu0 %v284
  %305 = vmatprep.subr.bf16.mxu0 0
  %306 = vmatpush1.bf16.msra.mxu0 %v285
  %307 = vmatprep.subr.bf16.mxu0 0
  %308 = vmatpush1.bf16.msra.mxu0 %v286
  %309 = vmatprep.subr.bf16.mxu0 0
  %310 = vmatpush1.bf16.msra.mxu0 %v287
  %311 = vmatprep.subr.bf16.mxu0 0
  %312 = vmatpush1.bf16.msra.mxu0 %v288
  %313 = vmatprep.subr.bf16.mxu0 0
  %314 = vmatpush1.bf16.msra.mxu0 0
  %315 = vmatprep.subr.bf16.mxu0 0
  %316 = vmatpush1.bf16.msra.mxu0 0
  %317 = vmatprep.subr.bf16.mxu0 0
  %318 = vmatpush1.bf16.msra.mxu0 0
  %319 = vmatprep.subr.bf16.mxu0 0
  %320 = vmatpush1.bf16.msra.mxu0 0
  %321 = vmatprep.subr.bf16.mxu0 0
  %322 = vmatpush1.bf16.msra.mxu0 0
  %323 = vmatprep.subr.bf16.mxu0 0
  %324 = vmatpush1.bf16.msra.mxu0 0
  %325 = vmatprep.subr.bf16.mxu0 0
  %326 = vmatpush1.bf16.msra.mxu0 0
  %327 = vmatprep.subr.bf16.mxu0 0
  %328 = vmatpush1.bf16.msra.mxu0 0
  %329 = vmatprep.mubr.bf16.mxu0 0
  %330 = vmatmul.mubr.bf16.gmra.mrb[0].mxu0 %v245
  %v331 = vpop.f32.mrb[0].mxu0
  %v332 = vadd.f32 0.0, %v331
  %v333 = vpop.f32.mrb[0].mxu0
  %v334 = vpop.f32.mrb[0].mxu0
  %v335 = vadd.f32 0.0, %v334
  %v336 = vpop.f32.mrb[0].mxu0
  %337 = vmatprep.mubr.bf16.mxu0 0
  %338 = vmatmul.mubr.bf16.gmra.mrb[0].mxu0 %v246
  %v339 = vpop.f32.mrb[0].mxu0
  %v340 = vadd.f32 0.0, %v339
  %v341 = vpop.f32.mrb[0].mxu0
  %v342 = vpop.f32.mrb[0].mxu0
  %v343 = vadd.f32 0.0, %v342
  %v344 = vpop.f32.mrb[0].mxu0
  %345 = vdwg.mxu0
  %v346 = vadd.f32 %v220, %v332
  %v347 = vadd.f32 %v221, %v335
  %v348 = vadd.f32 %v222, %v340
  %v349 = vadd.f32 %v223, %v343
  %350 = vst [vmem:[#allocation2] sm:$0xff] %v346
  %351 = vst [vmem:[#allocation2 + $0x8] sm:$0xff] %v347
  %352 = vst [vmem:[#allocation2 + $0x10] sm:$0xff] %v348
  %353 = vst [vmem:[#allocation2 + $0x18] sm:$0xff] %v349
  %vm356 = vcmask 1042432
  %vm357 = vcmask 1046532
  %vm358 = vmor %vm356, %vm357
  %v359 = vrot.slane %v26, 5
  %v360 = vrot.slane %v359, 4
  %v361 = vrot.slane %v27, 5
  %v362 = vsel %vm358, %v360, %v361
  %v363 = vrot.slane %v361, 4
  %v364 = vrot.slane %v28, 5
  %v365 = vsel %vm358, %v363, %v364
  %v366 = vrot.slane %v29, 5
  %v367 = vrot.slane %v366, 4
  %v368 = vrot.slane %v30, 5
  %v369 = vsel %vm358, %v367, %v368
  %v370 = vrot.slane %v368, 4
  %v371 = vrot.slane %v31, 5
  %v372 = vsel %vm358, %v370, %v371
  %v373 = vld [vmem:[#allocation2] sm:$0xff]
  %v374 = vld [vmem:[#allocation2 + $0x8] sm:$0xff]
  %v375 = vld [vmem:[#allocation2 + $0x10] sm:$0xff]
  %v376 = vld [vmem:[#allocation2 + $0x18] sm:$0xff]
  %s377 = scalar_lea.vmem %s1, 128
  %v378 = vld [vmem:[%s377] sm:$0xf]
  %v379 = vld [vmem:[%s377 + $0x4] sm:$0xf]
  %v380 = vld [vmem:[%s377 + $0x8] sm:$0xf]
  %v381 = vld [vmem:[%s377 + $0xc] sm:$0xf]
  %v382 = vld [vmem:[%s377 + $0x10] sm:$0xf]
  %v383 = vld [vmem:[%s377 + $0x14] sm:$0xf]
  %v384 = vld [vmem:[%s377 + $0x18] sm:$0xf]
  %v385 = vld [vmem:[%s377 + $0x1c] sm:$0xf]
  %v386 = vld [vmem:[%s377 + $0x20] sm:$0xf]
  %v387 = vld [vmem:[%s377 + $0x24] sm:$0xf]
  %v388 = vld [vmem:[%s377 + $0x28] sm:$0xf]
  %v389 = vld [vmem:[%s377 + $0x2c] sm:$0xf]
  %v390 = vld [vmem:[%s377 + $0x30] sm:$0xf]
  %v391 = vld [vmem:[%s377 + $0x34] sm:$0xf]
  %v392 = vld [vmem:[%s377 + $0x38] sm:$0xf]
  %v393 = vld [vmem:[%s377 + $0x3c] sm:$0xf]
  %v394 = vunpack.c.l.b16 %v362
  %v395 = vunpack.c.l.b16 %v365
  %v396 = vunpack.c.l.b16 %v369
  %v397 = vunpack.c.l.b16 %v372
  %v398 = vpack.c.b16 %v395, %v394
  %v399 = vpack.c.b16 %v397, %v396
  %v418 = vunpack.c.l.b16 %v378
  %v419 = vunpack.c.l.b16 %v379
  %v420 = vunpack.c.l.b16 %v380
  %v421 = vunpack.c.l.b16 %v381
  %v422 = vunpack.c.l.b16 %v382
  %v423 = vunpack.c.l.b16 %v383
  %v424 = vunpack.c.l.b16 %v384
  %v425 = vunpack.c.l.b16 %v385
  %v426 = vunpack.c.l.b16 %v386
  %v427 = vunpack.c.l.b16 %v387
  %v428 = vunpack.c.l.b16 %v388
  %v429 = vunpack.c.l.b16 %v389
  %v430 = vunpack.c.l.b16 %v390
  %v431 = vunpack.c.l.b16 %v391
  %v432 = vunpack.c.l.b16 %v392
  %v433 = vunpack.c.l.b16 %v393
  %v434 = vpack.c.b16 %v419, %v418
  %v435 = vpack.c.b16 %v421, %v420
  %v436 = vpack.c.b16 %v423, %v422
  %v437 = vpack.c.b16 %v425, %v424
  %v438 = vpack.c.b16 %v427, %v426
  %v439 = vpack.c.b16 %v429, %v428
  %v440 = vpack.c.b16 %v431, %v430
  %v441 = vpack.c.b16 %v433, %v432
  %450 = vmatprep.subr.bf16.mxu0 0
  %451 = vmatpush1.bf16.msra.mxu0 %v434
  %452 = vmatprep.subr.bf16.mxu0 0
  %453 = vmatpush1.bf16.msra.mxu0 %v435
  %454 = vmatprep.subr.bf16.mxu0 0
  %455 = vmatpush1.bf16.msra.mxu0 %v436
  %456 = vmatprep.subr.bf16.mxu0 0
  %457 = vmatpush1.bf16.msra.mxu0 %v437
  %458 = vmatprep.subr.bf16.mxu0 0
  %459 = vmatpush1.bf16.msra.mxu0 %v438
  %460 = vmatprep.subr.bf16.mxu0 0
  %461 = vmatpush1.bf16.msra.mxu0 %v439
  %462 = vmatprep.subr.bf16.mxu0 0
  %463 = vmatpush1.bf16.msra.mxu0 %v440
  %464 = vmatprep.subr.bf16.mxu0 0
  %465 = vmatpush1.bf16.msra.mxu0 %v441
  %466 = vmatprep.subr.bf16.mxu0 0
  %467 = vmatpush1.bf16.msra.mxu0 0
  %468 = vmatprep.subr.bf16.mxu0 0
  %469 = vmatpush1.bf16.msra.mxu0 0
  %470 = vmatprep.subr.bf16.mxu0 0
  %471 = vmatpush1.bf16.msra.mxu0 0
  %472 = vmatprep.subr.bf16.mxu0 0
  %473 = vmatpush1.bf16.msra.mxu0 0
  %474 = vmatprep.subr.bf16.mxu0 0
  %475 = vmatpush1.bf16.msra.mxu0 0
  %476 = vmatprep.subr.bf16.mxu0 0
  %477 = vmatpush1.bf16.msra.mxu0 0
  %478 = vmatprep.subr.bf16.mxu0 0
  %479 = vmatpush1.bf16.msra.mxu0 0
  %480 = vmatprep.subr.bf16.mxu0 0
  %481 = vmatpush1.bf16.msra.mxu0 0
  %482 = vmatprep.mubr.bf16.mxu0 0
  %483 = vmatmul.mubr.bf16.gmra.mrb[0].mxu0 %v398
  %v484 = vpop.f32.mrb[0].mxu0
  %v485 = vadd.f32 0.0, %v484
  %v486 = vpop.f32.mrb[0].mxu0
  %v487 = vpop.f32.mrb[0].mxu0
  %v488 = vadd.f32 0.0, %v487
  %v489 = vpop.f32.mrb[0].mxu0
  %490 = vmatprep.mubr.bf16.mxu0 0
  %491 = vmatmul.mubr.bf16.gmra.mrb[0].mxu0 %v399
  %v492 = vpop.f32.mrb[0].mxu0
  %v493 = vadd.f32 0.0, %v492
  %v494 = vpop.f32.mrb[0].mxu0
  %v495 = vpop.f32.mrb[0].mxu0
  %v496 = vadd.f32 0.0, %v495
  %v497 = vpop.f32.mrb[0].mxu0
  %498 = vdwg.mxu0
  %v499 = vadd.f32 %v373, %v485
  %v500 = vadd.f32 %v374, %v488
  %v501 = vadd.f32 %v375, %v493
  %v502 = vadd.f32 %v376, %v496
  %503 = vst [vmem:[#allocation2] sm:$0xff] %v499
  %504 = vst [vmem:[#allocation2 + $0x8] sm:$0xff] %v500
  %505 = vst [vmem:[#allocation2 + $0x10] sm:$0xff] %v501
  %506 = vst [vmem:[#allocation2 + $0x18] sm:$0xff] %v502
  %v507 = vld [vmem:[#allocation2] sm:$0xff]
  %v508 = vld [vmem:[#allocation2 + $0x8] sm:$0xff]
  %v509 = vld [vmem:[#allocation2 + $0x10] sm:$0xff]
  %v510 = vld [vmem:[#allocation2 + $0x18] sm:$0xff]
  %v511 = vtanh.pop %v507
  %v512 = vtanh.pop %v508
  %v513 = vtanh.pop %v509
  %v514 = vtanh.pop %v510
  %v515 = vmul.f32 %v511, 0.5
  %v516 = vmul.f32 %v512, 0.5
  %v517 = vmul.f32 %v513, 0.5
  %v518 = vmul.f32 %v514, 0.5
  %v519 = vadd.f32 %v515, 0.5
  %v520 = vadd.f32 %v516, 0.5
  %v521 = vadd.f32 %v517, 0.5
  %v522 = vadd.f32 %v518, 0.5
  %523 = vst [vmem:[%s3] sm:$0xff] %v519
  %524 = vst [vmem:[%s3 + $0x8] sm:$0xff] %v520
  %525 = vst [vmem:[%s3 + $0x10] sm:$0xff] %v521
  %526 = vst [vmem:[%s3 + $0x18] sm:$0xff] %v522
  // Predicated region
  $region14: #{conv_bn_tanh_2d_apply.1} parent=0 // pred_check
    _
  $region15: #{conv_bn_tanh_2d_apply.1} parent=0 // pred_check_branch
    %528 = sbr.rel (0) target = $region17
  $region16: #{conv_bn_tanh_2d_apply.1} parent=0 // pred_region
    _
  $region17: #{conv_bn_tanh_2d_apply.1} parent=0 // pred_fallthru
    _
  // Predicated region
  $region18: #{conv_bn_tanh_2d_apply.1} parent=0 // pred_check
    _
  $region19: #{conv_bn_tanh_2d_apply.1} parent=0 // pred_check_branch
    %530 = sbr.rel (0) target = $region21
  $region20: #{conv_bn_tanh_2d_apply.1} parent=0 // pred_region
    _
  $region21: #{conv_bn_tanh_2d_apply.1} parent=0 // pred_fallthru
    _

</llo_original>
